<compile_context>
chip_gen: v7x
topology: tpu7x:2x2x1
jax: 0.10.0
libtpu: 0.0.40
codegen_flags: <defaults>
</compile_context>

<pallas_src>
import math

import jax
import jax.numpy as jnp
from jax.experimental import pallas as pl
from jax.experimental.pallas import tpu as pltpu


def _round_up(x, m):
    return (x + m - 1) // m * m


def _vmem_capacity_bytes():
    try:
        return int(pltpu.get_tpu_info().vmem_capacity_bytes)
    except Exception:
        return 64 * 1024 * 1024  # conservative fallback (v7x per-core VMEM)


# ---------------------------------------------------------------------------
# Kernels
# ---------------------------------------------------------------------------
def ffn_kernel_resident(x_ref, w1_ref, b1_ref, w2_ref, b2_ref, o_ref):
    """Weights fully resident in VMEM; one pass per row tile (grid = (M tiles,))."""
    h = jnp.dot(x_ref[...], w1_ref[...], preferred_element_type=jnp.float32)
    h = jnp.maximum(h + b1_ref[...], 0.0)
    y = jnp.dot(h.astype(w2_ref.dtype), w2_ref[...],
                preferred_element_type=jnp.float32)
    o_ref[...] = (y + b2_ref[...]).astype(o_ref.dtype)


def ffn_kernel_streamed_f32out(x_ref, w1_ref, b1_ref, w2_ref, b2_ref, o_ref):
    """d_ff streamed in slabs; accumulate directly into the resident f32 output."""
    j = pl.program_id(1)

    @pl.when(j == 0)
    def _():
        # Fold fc2 bias into the init instead of a last-step epilogue add.
        o_ref[...] = jnp.broadcast_to(b2_ref[...], o_ref.shape)

    h = jnp.dot(x_ref[...], w1_ref[...], preferred_element_type=jnp.float32)
    h = jnp.maximum(h + b1_ref[...], 0.0)
    o_ref[...] += jnp.dot(h.astype(w2_ref.dtype), w2_ref[...],
                          preferred_element_type=jnp.float32)


def ffn_kernel_streamed_acc(x_ref, w1_ref, b1_ref, w2_ref, b2_ref, o_ref, acc_ref):
    """d_ff streamed; f32 scratch accumulator, cast to out dtype on the last slab."""
    j = pl.program_id(1)

    @pl.when(j == 0)
    def _():
        acc_ref[...] = jnp.broadcast_to(b2_ref[...], acc_ref.shape)

    h = jnp.dot(x_ref[...], w1_ref[...], preferred_element_type=jnp.float32)
    h = jnp.maximum(h + b1_ref[...], 0.0)
    acc_ref[...] += jnp.dot(h.astype(w2_ref.dtype), w2_ref[...],
                            preferred_element_type=jnp.float32)

    @pl.when(j == pl.num_programs(1) - 1)
    def _():
        o_ref[...] = acc_ref[...].astype(o_ref.dtype)


# ---------------------------------------------------------------------------
# Tile selection
# ---------------------------------------------------------------------------
def _pick_tm(M, target):
    """Padding-aware row tile: split M into ceil(M/target) near-equal tiles."""
    n_tiles = max(1, math.ceil(M / target))
    return _round_up(math.ceil(M / n_tiles), 16)


def _select_tiles(M, d_model, d_ff, in_isize, out_isize, out_is_f32, budget):
    """Choose (tm, tn_ff, weights_resident) under a VMEM byte budget."""

    def fits(tm, tn, resident):
        w = d_model * tn * in_isize * 2 * 2            # w1 + w2, double-buffered
        b = (tn + d_model) * 4 * 2 * 2                 # f32 biases, double-buffered
        x = tm * d_model * in_isize * 2                # x tile, double-buffered
        o = tm * d_model * out_isize * 2               # out tile, double-buffered
        h = tm * tn * (4 + in_isize)                   # f32 hidden + compute copy
        acc = 0 if (resident or out_is_f32) else tm * d_model * 4
        return (w + b + x + o + h + acc) <= budget

    tm_targets = (1024, 512, 256, 128, 64, 32, 16)

    # Prefer fully-resident weights: DMA'd once, reused across all row tiles.
    for t in tm_targets:
        tm = _pick_tm(M, t)
        if fits(tm, d_ff, True):
            return tm, d_ff, True

    # Otherwise stream d_ff slabs; prefer fat row tiles (higher arithmetic
    # intensity for the streamed-weight loop), then fat slabs (fewer acc RMWs).
    tn_targets = tuple(t for t in (1024, 512, 256, 128) if t < d_ff)
    for t in tm_targets:
        tm = _pick_tm(M, t)
        for tn in tn_targets:
            if fits(tm, tn, False):
                return tm, tn, False

    # Fallback (pathological budgets): smallest legal configuration.
    if d_ff <= 128:
        return _pick_tm(M, 64), d_ff, True
    return _pick_tm(M, 64), 128, False


# ---------------------------------------------------------------------------
# Wrapper
# ---------------------------------------------------------------------------
def feed_forward(x, w1, b1, w2, b2, *, compute_dtype=None, vmem_budget_bytes=None):
    """Position-wise FFN: fc2(relu(fc1(x))).

    x:  (batch, seq, d_model)
    w1: (d_model, d_ff)   b1: (d_ff,)      (weights pre-transposed vs. nn.Linear)
    w2: (d_ff, d_model)   b2: (d_model,)

    compute_dtype defaults to x.dtype. Recommended: store x/w1/w2 in bfloat16
    at the caller (bf16 MXU matmuls, f32 accumulation, no wrapper-side casts).
    """
    batch, seq, d_model = x.shape
    d_ff = w1.shape[1]
    out_dtype = x.dtype
    if compute_dtype is None:
        compute_dtype = x.dtype
    compute_dtype = jnp.dtype(compute_dtype)
    out_is_f32 = jnp.dtype(out_dtype) == jnp.dtype(jnp.float32)

    M = batch * seq
    in_isize = compute_dtype.itemsize
    out_isize = jnp.dtype(out_dtype).itemsize

    capacity = _vmem_capacity_bytes()
    budget = int(0.70 * capacity) if vmem_budget_bytes is None else int(vmem_budget_bytes)
    vmem_limit = int(0.70 * capacity)

    tm, tn_ff, resident = _select_tiles(
        M, d_model, d_ff, in_isize, out_isize, out_is_f32, budget)

    # Megacore (v7x has 2 TensorCores): ensure the "parallel" M axis has at
    # least two tiles when there is enough work to split.
    if M >= 256 and math.ceil(M / tm) == 1:
        tm = _round_up(math.ceil(M / 2), 16)

    M_pad = _round_up(M, tm)
    d_ff_pad = d_ff if resident else _round_up(d_ff, tn_ff)

    # ---- Prepare operands (cast / pad only when actually needed). ----
    x2d = x.reshape(M, d_model)
    if x2d.dtype != compute_dtype:
        x2d = x2d.astype(compute_dtype)
    if M_pad != M:
        x2d = jnp.pad(x2d, ((0, M_pad - M), (0, 0)))

    w1c = w1 if w1.dtype == compute_dtype else w1.astype(compute_dtype)
    w2c = w2 if w2.dtype == compute_dtype else w2.astype(compute_dtype)
    b1f = b1.reshape(1, d_ff).astype(jnp.float32)
    b2f = b2.reshape(1, d_model).astype(jnp.float32)
    if d_ff_pad != d_ff:
        # Zero padding is exact: relu(0 + 0) = 0 rows hit zero w2 rows.
        w1c = jnp.pad(w1c, ((0, 0), (0, d_ff_pad - d_ff)))
        b1f = jnp.pad(b1f, ((0, 0), (0, d_ff_pad - d_ff)))
        w2c = jnp.pad(w2c, ((0, d_ff_pad - d_ff), (0, 0)))

    n_row_tiles = M_pad // tm
    weight_bytes = (w1c.size + w2c.size) * in_isize

    cost = pl.CostEstimate(
        flops=2 * 2 * M_pad * d_model * d_ff_pad,
        transcendentals=0,
        bytes_accessed=(x2d.size * in_isize
                        + M_pad * d_model * out_isize
                        + weight_bytes * (1 if resident else n_row_tiles)),
    )

    if resident:
        grid = (n_row_tiles,)
        in_specs = [
            pl.BlockSpec((tm, d_model), lambda i: (i, 0)),          # x row tile
            pl.BlockSpec((d_model, d_ff_pad), lambda i: (0, 0)),    # w1 (resident)
            pl.BlockSpec((1, d_ff_pad), lambda i: (0, 0)),          # b1 (f32)
            pl.BlockSpec((d_ff_pad, d_model), lambda i: (0, 0)),    # w2 (resident)
            pl.BlockSpec((1, d_model), lambda i: (0, 0)),           # b2 (f32)
        ]
        out_specs = pl.BlockSpec((tm, d_model), lambda i: (i, 0))
        kernel = ffn_kernel_resident
        scratch_shapes = []
        dims = ("parallel",)
    else:
        # TODO(synk): consider pipeline_mode=pl.Buffered(3) on w1/w2 when slab
        # DMA is still exposed and the VMEM budget has headroom (v5e/v6e).
        grid = (n_row_tiles, d_ff_pad // tn_ff)
        in_specs = [
            pl.BlockSpec((tm, d_model), lambda i, j: (i, 0)),       # x row tile
            pl.BlockSpec((d_model, tn_ff), lambda i, j: (0, j)),    # w1 slab
            pl.BlockSpec((1, tn_ff), lambda i, j: (0, j)),          # b1 slab (f32)
            pl.BlockSpec((tn_ff, d_model), lambda i, j: (j, 0)),    # w2 slab
            pl.BlockSpec((1, d_model), lambda i, j: (0, 0)),        # b2 (f32)
        ]
        out_specs = pl.BlockSpec((tm, d_model), lambda i, j: (i, 0))
        if out_is_f32:
            kernel = ffn_kernel_streamed_f32out
            scratch_shapes = []
        else:
            kernel = ffn_kernel_streamed_acc
            scratch_shapes = [pltpu.VMEM((tm, d_model), jnp.float32)]
        dims = ("parallel", "arbitrary")

    out2d = pl.pallas_call(
        kernel,
        out_shape=jax.ShapeDtypeStruct((M_pad, d_model), out_dtype),
        grid_spec=pltpu.PrefetchScalarGridSpec(
            num_scalar_prefetch=0,
            grid=grid,
            in_specs=in_specs,
            out_specs=out_specs,
            scratch_shapes=scratch_shapes,
        ),
        compiler_params=pltpu.CompilerParams(
            dimension_semantics=dims,
            vmem_limit_bytes=vmem_limit),
        cost_estimate=cost,
    )(x2d, w1c, b1f, w2c, b2f)

    return out2d[:M].reshape(batch, seq, d_model)


if __name__ == "__main__":
    def ref_ffn(x, w1, b1, w2, b2):
        return jnp.maximum(x @ w1 + b1, 0.0) @ w2 + b2

    key = jax.random.PRNGKey(0)

    # ---- Test 1: small f32 shapes (resident-weight path). ----
    batch, seq, d_model, d_ff = 2, 8, 32, 64
    kx, kw1, kb1, kw2, kb2 = jax.random.split(key, 5)
    x = jax.random.normal(kx, (batch, seq, d_model), dtype=jnp.float32)
    w1 = jax.random.normal(kw1, (d_model, d_ff), dtype=jnp.float32) * 0.05
    b1 = jax.random.normal(kb1, (d_ff,), dtype=jnp.float32) * 0.01
    w2 = jax.random.normal(kw2, (d_ff, d_model), dtype=jnp.float32) * 0.05
    b2 = jax.random.normal(kb2, (d_model,), dtype=jnp.float32) * 0.01
    ref = ref_ffn(x, w1, b1, w2, b2)
    out = jax.block_until_ready(feed_forward(x, w1, b1, w2, b2))
    assert out.shape == (batch, seq, d_model)
    assert jnp.allclose(out, ref, atol=1e-5, rtol=1e-5)

    # ---- Test 2: recommended path — activations/weights stored in bf16 at the
    #      caller (no wrapper-side casts), f32 accumulation inside the kernel. ----
    out_bf16 = jax.block_until_ready(
        feed_forward(x.astype(jnp.bfloat16), w1.astype(jnp.bfloat16), b1,
                     w2.astype(jnp.bfloat16), b2))
    assert out_bf16.dtype == jnp.bfloat16
    assert jnp.allclose(out_bf16.astype(jnp.float32), ref, atol=2e-2, rtol=2e-2)

    # ---- Test 3: ragged M (300) → padding-aware row tiles + megacore split. ----
    d_model3, d_ff3 = 128, 256
    k3 = jax.random.split(jax.random.PRNGKey(1), 5)
    x3 = jax.random.normal(k3[0], (3, 100, d_model3), dtype=jnp.float32)   # M=300
    w13 = jax.random.normal(k3[1], (d_model3, d_ff3), dtype=jnp.float32) * 0.03
    b13 = jax.random.normal(k3[2], (d_ff3,), dtype=jnp.float32) * 0.01
    w23 = jax.random.normal(k3[3], (d_ff3, d_model3), dtype=jnp.float32) * 0.03
    b23 = jax.random.normal(k3[4], (d_model3,), dtype=jnp.float32) * 0.01
    ref3 = ref_ffn(x3, w13, b13, w23, b23)
    out3 = jax.block_until_ready(feed_forward(x3, w13, b13, w23, b23))
    assert out3.shape == x3.shape
    assert jnp.allclose(out3, ref3, atol=1e-4, rtol=1e-4)

    # ---- Test 4: streamed-d_ff path, f32 output accumulated in-place
    #      (tiny budget forces d_ff slabs; d_ff 320 pads to 384 = 3 slabs). ----
    d_model4, d_ff4 = 128, 320
    k4 = jax.random.split(jax.random.PRNGKey(2), 5)
    x4 = jax.random.normal(k4[0], (3, 40, d_model4), dtype=jnp.float32)    # M=120
    w14 = jax.random.normal(k4[1], (d_model4, d_ff4), dtype=jnp.float32) * 0.03
    b14 = jax.random.normal(k4[2], (d_ff4,), dtype=jnp.float32) * 0.01
    w24 = jax.random.normal(k4[3], (d_ff4, d_model4), dtype=jnp.float32) * 0.03
    b24 = jax.random.normal(k4[4], (d_model4,), dtype=jnp.float32) * 0.01
    ref4 = ref_ffn(x4, w14, b14, w24, b24)
    out4 = jax.block_until_ready(
        feed_forward(x4, w14, b14, w24, b24, vmem_budget_bytes=512 * 1024))
    assert jnp.allclose(out4, ref4, atol=1e-4, rtol=1e-4)

    # ---- Test 5: streamed path with bf16 output (f32 scratch accumulator). ----
    out5 = jax.block_until_ready(
        feed_forward(x4.astype(jnp.bfloat16), w14.astype(jnp.bfloat16), b14,
                     w24.astype(jnp.bfloat16), b24,
                     vmem_budget_bytes=320 * 1024))
    assert out5.dtype == jnp.bfloat16
    assert jnp.allclose(out5.astype(jnp.float32), ref4, atol=2e-2, rtol=2e-2)

    print("KERNEL_OK")
</pallas_src>

<mosaic_0001>
module attributes {stable_mosaic.version = 11 : i64} {
  func.func @ffn_kernel_resident(%arg0: i32, %arg1: memref<16x32xf32, #tpu.memory_space<vmem>>, %arg2: memref<32x64xf32, #tpu.memory_space<vmem>>, %arg3: memref<1x64xf32, #tpu.memory_space<vmem>>, %arg4: memref<64x32xf32, #tpu.memory_space<vmem>>, %arg5: memref<1x32xf32, #tpu.memory_space<vmem>>, %arg6: memref<16x32xf32, #tpu.memory_space<vmem>>) attributes {dimension_semantics = [#tpu.dimension_semantics<parallel>], iteration_bounds = array<i64: 1>, scalar_prefetch = 0 : i64, scratch_operands = 0 : i64, tpu.core_type = #tpu.core_type<tc>, window_params = [{transform_indices = @transform_0, window_bounds = array<i64: 16, 32>}, {pipeline_mode = #tpu.pipeline_mode<synchronous>, transform_indices = @transform_1, window_bounds = array<i64: 32, 64>}, {pipeline_mode = #tpu.pipeline_mode<synchronous>, transform_indices = @transform_2, window_bounds = array<i64: 1, 64>}, {pipeline_mode = #tpu.pipeline_mode<synchronous>, transform_indices = @transform_3, window_bounds = array<i64: 64, 32>}, {pipeline_mode = #tpu.pipeline_mode<synchronous>, transform_indices = @transform_4, window_bounds = array<i64: 1, 32>}, {transform_indices = @transform_5, window_bounds = array<i64: 16, 32>}]} {
    %c0 = arith.constant 0 : index
    %c0_0 = arith.constant 0 : index
    %0 = vector.load %arg1[%c0, %c0_0] : memref<16x32xf32, #tpu.memory_space<vmem>>, vector<16x32xf32>
    %c0_1 = arith.constant 0 : index
    %c0_2 = arith.constant 0 : index
    %1 = vector.load %arg2[%c0_1, %c0_2] : memref<32x64xf32, #tpu.memory_space<vmem>>, vector<32x64xf32>
    %cst = arith.constant dense<0.000000e+00> : vector<16x64xf32>
    %2 = tpu.matmul %0, %1, %cst {dimension_numbers = #tpu.dot_dimension_numbers<[1], [0], [0], [1], [0, 0, 1, 1], [], []>} : vector<16x32xf32>, vector<32x64xf32>, vector<16x64xf32> -> vector<16x64xf32>
    %c0_3 = arith.constant 0 : index
    %c0_4 = arith.constant 0 : index
    %3 = vector.load %arg3[%c0_3, %c0_4] : memref<1x64xf32, #tpu.memory_space<vmem>>, vector<1x64xf32>
    %4 = vector.broadcast %3 : vector<1x64xf32> to vector<16x64xf32>
    %5 = arith.addf %2, %4 : vector<16x64xf32>
    %cst_5 = arith.constant 0.000000e+00 : f32
    %6 = vector.broadcast %cst_5 : f32 to vector<16x64xf32>
    %7 = arith.maximumf %5, %6 : vector<16x64xf32>
    %c0_6 = arith.constant 0 : index
    %c0_7 = arith.constant 0 : index
    %8 = vector.load %arg4[%c0_6, %c0_7] : memref<64x32xf32, #tpu.memory_space<vmem>>, vector<64x32xf32>
    %cst_8 = arith.constant dense<0.000000e+00> : vector<16x32xf32>
    %9 = tpu.matmul %7, %8, %cst_8 {dimension_numbers = #tpu.dot_dimension_numbers<[1], [0], [0], [1], [0, 0, 1, 1], [], []>} : vector<16x64xf32>, vector<64x32xf32>, vector<16x32xf32> -> vector<16x32xf32>
    %c0_9 = arith.constant 0 : index
    %c0_10 = arith.constant 0 : index
    %10 = vector.load %arg5[%c0_9, %c0_10] : memref<1x32xf32, #tpu.memory_space<vmem>>, vector<1x32xf32>
    %11 = vector.broadcast %10 : vector<1x32xf32> to vector<16x32xf32>
    %12 = arith.addf %9, %11 : vector<16x32xf32>
    %c0_11 = arith.constant 0 : index
    %c0_12 = arith.constant 0 : index
    %13 = vector.load %arg6[%c0_11, %c0_12] : memref<16x32xf32, #tpu.memory_space<vmem>>, vector<16x32xf32>
    tpu.vector_store %arg6[%c0_11, %c0_12], %12 {strides = array<i32>} : memref<16x32xf32, #tpu.memory_space<vmem>>, vector<16x32xf32>,
    return
  }
  func.func @transform_0(%arg0: i32) -> (i32, i32) {
    %c0_i32 = arith.constant 0 : i32
    %c0_i32_0 = arith.constant 0 : i32
    return %arg0, %c0_i32 : i32, i32
  }
  func.func @transform_1(%arg0: i32) -> (i32, i32) {
    %c0_i32 = arith.constant 0 : i32
    %c0_i32_0 = arith.constant 0 : i32
    %c0_i32_1 = arith.constant 0 : i32
    return %c0_i32, %c0_i32_0 : i32, i32
  }
  func.func @transform_2(%arg0: i32) -> (i32, i32) {
    %c0_i32 = arith.constant 0 : i32
    %c0_i32_0 = arith.constant 0 : i32
    %c0_i32_1 = arith.constant 0 : i32
    return %c0_i32, %c0_i32_0 : i32, i32
  }
  func.func @transform_3(%arg0: i32) -> (i32, i32) {
    %c0_i32 = arith.constant 0 : i32
    %c0_i32_0 = arith.constant 0 : i32
    %c0_i32_1 = arith.constant 0 : i32
    return %c0_i32, %c0_i32_0 : i32, i32
  }
  func.func @transform_4(%arg0: i32) -> (i32, i32) {
    %c0_i32 = arith.constant 0 : i32
    %c0_i32_0 = arith.constant 0 : i32
    %c0_i32_1 = arith.constant 0 : i32
    return %c0_i32, %c0_i32_0 : i32, i32
  }
  func.func @transform_5(%arg0: i32) -> (i32, i32) {
    %c0_i32 = arith.constant 0 : i32
    %c0_i32_0 = arith.constant 0 : i32
    return %arg0, %c0_i32 : i32, i32
  }
}

</mosaic_0001>

<llo_original>
// kernel: tpu_custom_call.1
$region0: #{tpu_custom_call.1}
  #allocation0 [shape = 'u32[]', space=smem, size = 0x4, offset = 0x4, fixed_abs, tag = 'smem constant byte address 0x4 - core index']
  #allocation1 [shape = 'u32[144,128]{1,0:T(1,128)}', space=vmem, size = 0x12000, scoped, tag = 'internal scratch']
  %s0 = inlined_call_operand.vmem [shape: f32[16,32], index: 0, kind: input, shape index: {}]
  %s1 = inlined_call_operand.vmem [shape: f32[32,64], index: 1, kind: input, shape index: {}]
  %s2 = inlined_call_operand.vmem [shape: f32[1,64], index: 2, kind: input, shape index: {}]
  %s3 = inlined_call_operand.vmem [shape: f32[64,32], index: 3, kind: input, shape index: {}]
  %s4 = inlined_call_operand.vmem [shape: f32[1,32], index: 4, kind: input, shape index: {}]
  %s5 = inlined_call_operand.hbm [shape: f32[16,32], index: 5, kind: output, shape index: {}]
  %s6 = sld [smem:[#allocation0]]
  $region30: #{tpu_custom_call.1} parent=0
    _
  %s8 = ssub.s32 1, %s6
  %s9 = scalar_select 0, %s8, %s6
  $region1: #{tpu_custom_call.1} parent=0
    #allocation2 [shape = 'u8[8192]{0}', space=vmem, size = 0x2000, scoped, tag = 'output window, operand 0, single buffered']
    #allocation3 [shape = 's32[1]{0}', space=sflag, size = 0x4, scoped, tag = 'scoped memory for tpu_custom_call.1']
    %10 = vsyncpa [#allocation3], 0
    // Predicated region
    $region2: #{tpu_custom_call.1} parent=1 // pred_check
      _
    $region3: #{tpu_custom_call.1} parent=1 // pred_check_branch
      %12 = sbr.rel (0) target = $region5
    $region4: #{tpu_custom_call.1} parent=1 // pred_region
      _
    $region5: #{tpu_custom_call.1} parent=1 // pred_fallthru
      _
    // Predicated region
    $region6: #{tpu_custom_call.1} parent=1 // pred_check
      _
    $region7: #{tpu_custom_call.1} parent=1 // pred_check_branch
      %14 = sbr.rel (0) target = $region9
    $region8: #{tpu_custom_call.1} parent=1 // pred_region
      _
    $region9: #{tpu_custom_call.1} parent=1 // pred_fallthru
      _
    // Predicated region
    $region10: #{tpu_custom_call.1} parent=1 // pred_check
      _
    $region11: #{tpu_custom_call.1} parent=1 // pred_check_branch
      %16 = sbr.rel (0) target = $region13
    $region12: #{tpu_custom_call.1} parent=1 // pred_region
      _
    $region13: #{tpu_custom_call.1} parent=1 // pred_fallthru
      _
    // Predicated region
    $region14: #{tpu_custom_call.1} parent=1 // pred_check
      _
    $region15: #{tpu_custom_call.1} parent=1 // pred_check_branch
      %18 = sbr.rel (0) target = $region17
    $region16: #{tpu_custom_call.1} parent=1 // pred_region
      _
    $region17: #{tpu_custom_call.1} parent=1 // pred_fallthru
      _
    // Predicated region
    $region18: #{tpu_custom_call.1} parent=1 // pred_check
      _
    $region19: #{tpu_custom_call.1} parent=1 // pred_check_branch
      %20 = sbr.rel (0) target = $region21
    $region20: #{tpu_custom_call.1} parent=1 // pred_region
      _
    $region21: #{tpu_custom_call.1} parent=1 // pred_fallthru
      _
    %v21 = vld [vmem:[%s0] sm:$0xff]
    %v22 = vld [vmem:[%s0 + $0x8] sm:$0xff]
    %v23 = vld [vmem:[%s1] sm:$0xff]
    %v24 = vld [vmem:[%s1 + $0x8] sm:$0xff]
    %v25 = vld [vmem:[%s1 + $0x10] sm:$0xff]
    %v26 = vld [vmem:[%s1 + $0x18] sm:$0xff]
    %v27 = vld [vmem:[%s2] sm:$0x1]
    %v29 = vlaneseq
    %v30 = vshrl.u32 %v29, 7
    %v31 = vsub.s32 0, %v30
    %v32 = vrot.slane %v27, %v31
    %vm34 = vcmask 261120
    %v36 = vsel %vm34, %v21, 0
    %v39 = vsel %vm34, %v22, 0
    %41 = vmatprep.subr.mxu0 0.0
    %42 = vmatpush1.msra.mxu0 %v23
    %43 = vmatprep.subr.mxu0 0.0
    %44 = vmatpush1.msra.mxu0 %v24
    %45 = vmatprep.subr.mxu0 0.0
    %46 = vmatpush1.msra.mxu0 %v25
    %47 = vmatprep.subr.mxu0 0.0
    %48 = vmatpush1.msra.mxu0 %v26
    %49 = vmatprep.subr.mxu0 0.0
    %50 = vmatpush1.msra.mxu0 0.0
    %51 = vmatprep.subr.mxu0 0.0
    %52 = vmatpush1.msra.mxu0 0.0
    %53 = vmatprep.subr.mxu0 0.0
    %54 = vmatpush1.msra.mxu0 0.0
    %55 = vmatprep.subr.mxu0 0.0
    %56 = vmatpush1.msra.mxu0 0.0
    %57 = vmatprep.subr.mxu0 0.0
    %58 = vmatpush1.msra.mxu0 0.0
    %59 = vmatprep.subr.mxu0 0.0
    %60 = vmatpush1.msra.mxu0 0.0
    %61 = vmatprep.subr.mxu0 0.0
    %62 = vmatpush1.msra.mxu0 0.0
    %63 = vmatprep.subr.mxu0 0.0
    %64 = vmatpush1.msra.mxu0 0.0
    %65 = vmatprep.subr.mxu0 0.0
    %66 = vmatpush1.msra.mxu0 0.0
    %67 = vmatprep.subr.mxu0 0.0
    %68 = vmatpush1.msra.mxu0 0.0
    %69 = vmatprep.subr.mxu0 0.0
    %70 = vmatpush1.msra.mxu0 0.0
    %71 = vmatprep.subr.mxu0 0.0
    %72 = vmatpush1.msra.mxu0 0.0
    %73 = vmatprep.subr.mxu0 0.0
    %74 = vmatpush1.msra.mxu0 0.0
    %75 = vmatprep.subr.mxu0 0.0
    %76 = vmatpush1.msra.mxu0 0.0
    %77 = vmatprep.subr.mxu0 0.0
    %78 = vmatpush1.msra.mxu0 0.0
    %79 = vmatprep.subr.mxu0 0.0
    %80 = vmatpush1.msra.mxu0 0.0
    %81 = vmatprep.subr.mxu0 0.0
    %82 = vmatpush1.msra.mxu0 0.0
    %83 = vmatprep.subr.mxu0 0.0
    %84 = vmatpush1.msra.mxu0 0.0
    %85 = vmatprep.subr.mxu0 0.0
    %86 = vmatpush1.msra.mxu0 0.0
    %87 = vmatprep.subr.mxu0 0.0
    %88 = vmatpush1.msra.mxu0 0.0
    %89 = vmatprep.subr.mxu0 0.0
    %90 = vmatpush1.msra.mxu0 0.0
    %91 = vmatprep.subr.mxu0 0.0
    %92 = vmatpush1.msra.mxu0 0.0
    %93 = vmatprep.subr.mxu0 0.0
    %94 = vmatpush1.msra.mxu0 0.0
    %95 = vmatprep.subr.mxu0 0.0
    %96 = vmatpush1.msra.mxu0 0.0
    %97 = vmatprep.subr.mxu0 0.0
    %98 = vmatpush1.msra.mxu0 0.0
    %99 = vmatprep.subr.mxu0 0.0
    %100 = vmatpush1.msra.mxu0 0.0
    %101 = vmatprep.subr.mxu0 0.0
    %102 = vmatpush1.msra.mxu0 0.0
    %103 = vmatprep.subr.mxu0 0.0
    %104 = vmatpush1.msra.mxu0 0.0
    %105 = vmatprep.mubr.f32.mxu0 0.0
    %106 = vmatmul.mubr.f32.gmra.mrb[0].mxu0 %v36
    %v107 = vpop.f32.mrb[0].mxu0
    %v108 = vadd.f32 %v32, %v107
    %v109 = vpop.f32.mrb[0].mxu0
    %110 = vmatprep.mubr.f32.mxu0 0.0
    %111 = vmatmul.mubr.f32.gmra.mrb[0].mxu0 %v39
    %v112 = vpop.f32.mrb[0].mxu0
    %v113 = vadd.f32 %v32, %v112
    %v114 = vpop.f32.mrb[0].mxu0
    %115 = vdwg.mxu0
    %v116 = vmax.f32 %v108, 0.0
    %v117 = vmax.f32 %v113, 0.0
    %v118 = vld [vmem:[%s3] sm:$0xff]
    %v119 = vld [vmem:[%s3 + $0x8] sm:$0xff]
    %v120 = vld [vmem:[%s3 + $0x10] sm:$0xff]
    %v121 = vld [vmem:[%s3 + $0x18] sm:$0xff]
    %v122 = vld [vmem:[%s3 + $0x20] sm:$0xff]
    %v123 = vld [vmem:[%s3 + $0x28] sm:$0xff]
    %v124 = vld [vmem:[%s3 + $0x30] sm:$0xff]
    %v125 = vld [vmem:[%s3 + $0x38] sm:$0xff]
    %v126 = vld [vmem:[%s4] sm:$0x1]
    %v128 = vlaneseq
    %v129 = vshrl.u32 %v128, 7
    %v130 = vsub.s32 0, %v129
    %v131 = vrot.slane %v126, %v130
    %vm133 = vcmask 523264
    %v135 = vsel %vm133, %v116, 0
    %v138 = vsel %vm133, %v117, 0
    %140 = vmatprep.subr.mxu0 0.0
    %141 = vmatpush1.msra.mxu0 %v118
    %142 = vmatprep.subr.mxu0 0.0
    %143 = vmatpush1.msra.mxu0 %v119
    %144 = vmatprep.subr.mxu0 0.0
    %145 = vmatpush1.msra.mxu0 %v120
    %146 = vmatprep.subr.mxu0 0.0
    %147 = vmatpush1.msra.mxu0 %v121
    %148 = vmatprep.subr.mxu0 0.0
    %149 = vmatpush1.msra.mxu0 %v122
    %150 = vmatprep.subr.mxu0 0.0
    %151 = vmatpush1.msra.mxu0 %v123
    %152 = vmatprep.subr.mxu0 0.0
    %153 = vmatpush1.msra.mxu0 %v124
    %154 = vmatprep.subr.mxu0 0.0
    %155 = vmatpush1.msra.mxu0 %v125
    %156 = vmatprep.subr.mxu0 0.0
    %157 = vmatpush1.msra.mxu0 0.0
    %158 = vmatprep.subr.mxu0 0.0
    %159 = vmatpush1.msra.mxu0 0.0
    %160 = vmatprep.subr.mxu0 0.0
    %161 = vmatpush1.msra.mxu0 0.0
    %162 = vmatprep.subr.mxu0 0.0
    %163 = vmatpush1.msra.mxu0 0.0
    %164 = vmatprep.subr.mxu0 0.0
    %165 = vmatpush1.msra.mxu0 0.0
    %166 = vmatprep.subr.mxu0 0.0
    %167 = vmatpush1.msra.mxu0 0.0
    %168 = vmatprep.subr.mxu0 0.0
    %169 = vmatpush1.msra.mxu0 0.0
    %170 = vmatprep.subr.mxu0 0.0
    %171 = vmatpush1.msra.mxu0 0.0
    %172 = vmatprep.subr.mxu0 0.0
    %173 = vmatpush1.msra.mxu0 0.0
    %174 = vmatprep.subr.mxu0 0.0
    %175 = vmatpush1.msra.mxu0 0.0
    %176 = vmatprep.subr.mxu0 0.0
    %177 = vmatpush1.msra.mxu0 0.0
    %178 = vmatprep.subr.mxu0 0.0
    %179 = vmatpush1.msra.mxu0 0.0
    %180 = vmatprep.subr.mxu0 0.0
    %181 = vmatpush1.msra.mxu0 0.0
    %182 = vmatprep.subr.mxu0 0.0
    %183 = vmatpush1.msra.mxu0 0.0
    %184 = vmatprep.subr.mxu0 0.0
    %185 = vmatpush1.msra.mxu0 0.0
    %186 = vmatprep.subr.mxu0 0.0
    %187 = vmatpush1.msra.mxu0 0.0
    %188 = vmatprep.subr.mxu0 0.0
    %189 = vmatpush1.msra.mxu0 0.0
    %190 = vmatprep.subr.mxu0 0.0
    %191 = vmatpush1.msra.mxu0 0.0
    %192 = vmatprep.subr.mxu0 0.0
    %193 = vmatpush1.msra.mxu0 0.0
    %194 = vmatprep.subr.mxu0 0.0
    %195 = vmatpush1.msra.mxu0 0.0
    %196 = vmatprep.subr.mxu0 0.0
    %197 = vmatpush1.msra.mxu0 0.0
    %198 = vmatprep.subr.mxu0 0.0
    %199 = vmatpush1.msra.mxu0 0.0
    %200 = vmatprep.subr.mxu0 0.0
    %201 = vmatpush1.msra.mxu0 0.0
    %202 = vmatprep.subr.mxu0 0.0
    %203 = vmatpush1.msra.mxu0 0.0
    %204 = vmatprep.mubr.f32.mxu0 0.0
    %205 = vmatmul.mubr.f32.gmra.mrb[0].mxu0 %v135
    %v206 = vpop.f32.mrb[0].mxu0
    %v207 = vadd.f32 %v131, %v206
    %v208 = vpop.f32.mrb[0].mxu0
    %209 = vmatprep.mubr.f32.mxu0 0.0
    %210 = vmatmul.mubr.f32.gmra.mrb[0].mxu0 %v138
    %v211 = vpop.f32.mrb[0].mxu0
    %v212 = vadd.f32 %v131, %v211
    %v213 = vpop.f32.mrb[0].mxu0
    %214 = vdwg.mxu0
    %215 = vst.msk [vmem:[#allocation2] sm:$0xff] %vm34, %v207
    %216 = vst.msk [vmem:[#allocation2 + $0x8] sm:$0xff] %vm34, %v212
    // Predicated region
    $region22: #{tpu_custom_call.1} parent=1 // pred_check
      _
    $region23: #{tpu_custom_call.1} parent=1 // pred_check_branch
      %218 = sbr.rel (0) target = $region25
    $region24: #{tpu_custom_call.1} parent=1 // pred_region
      %s220 = ssub.s32 256, 256
      %221 = vsyncadd [#allocation3], %s220
      %s222 = sshll.u32 [#allocation2], 4
      %s223 = int_to_ptr.vmem [resolvable:$true] %s222
      %228 = dma.vmem_to_hbm [thread:$0]  %s223, 256, %s5, [#allocation3], 128, 128, 8
    $region25: #{tpu_custom_call.1} parent=1 // pred_fallthru
      _
    // Predicated region
    $region26: #{tpu_custom_call.1} parent=1 // pred_check
      _
    $region27: #{tpu_custom_call.1} parent=1 // pred_check_branch
      %230 = sbr.rel (0) target = $region29
    $region28: #{tpu_custom_call.1} parent=1 // pred_region
      %231 = dma.done [#allocation3], 256
    $region29: #{tpu_custom_call.1} parent=1 // pred_fallthru
      _
    %232 = vsyncpa [#allocation3], 1

</llo_original>
